<compile_context>
chip_gen: v7x
topology: tpu7x:2x2x1
jax: 0.10.0
libtpu: 0.0.40
codegen_flags: <defaults>
</compile_context>

<pallas_src>
import functools

import jax
import jax.numpy as jnp
from jax.experimental import pallas as pl
from jax.experimental.pallas import tpu as pltpu

LOG_SIG_MIN, LOG_SIG_MAX = -20.0, 2.0


def _policy_kernel(s_ref, g_ref,
                   w1s_ref, w1g_ref, b1_ref,
                   w2_ref, b2_ref,
                   wh_ref, bh_ref,
                   out_ref,
                   *, action_dim):
    # layer 1: state/goal fed separately (no host-side concat); two MXU pushes
    h = jnp.dot(s_ref[...], w1s_ref[...], preferred_element_type=jnp.float32)
    h = h + jnp.dot(g_ref[...], w1g_ref[...], preferred_element_type=jnp.float32)
    h = jnp.maximum(h + b1_ref[...], 0.0)
    # layer 2
    h = jnp.dot(h, w2_ref[...], preferred_element_type=jnp.float32)
    h = jnp.maximum(h + b2_ref[...], 0.0)
    # fused heads: columns [0, A) = mean, [A, 2A) = log_std, rest = zero pad
    z = jnp.dot(h, wh_ref[...], preferred_element_type=jnp.float32) + bh_ref[...]
    std = jnp.exp(jnp.clip(z, LOG_SIG_MIN, LOG_SIG_MAX))          # EUP slot
    col = jax.lax.broadcasted_iota(jnp.int32, z.shape, 1)
    is_std = (col >= action_dim) & (col < 2 * action_dim)
    # single lane-dense (tb, 128k) unmasked store
    out_ref[...] = jnp.where(is_std, std, z)


def _default_batch_tile(B):
    """Largest multiple-of-8 tile dividing B, capped at 1024 rows, preferring
    >= 2 grid steps (pipelining + both TensorCores on v7x)."""
    caps = (1024, 512, 256, 128, 64, 32, 16, 8)
    for t in caps:
        if t <= B // 2 and B % t == 0:
            return t
    for t in caps:
        if t <= B and B % t == 0:
            return t
    return B


def gaussian_policy_forward(state, goal, params, *, batch_tile=None):
    """Forward pass of GaussianPolicy. Returns (mean, std) of the Normal."""
    w1, b1, w2, b2, wm, bm, wls, bls = params
    B, S = state.shape
    assert goal.shape == (B, S)
    H1 = w1.shape[1]
    H2 = w2.shape[1]
    A = wm.shape[1]

    # split the first-layer weight so the (state, goal) concat never hits HBM
    w1s = w1[:S]
    w1g = w1[S:]

    # fuse the two heads and zero-pad the output slab to a multiple of 128 lanes
    Dp = ((2 * A + 127) // 128) * 128
    wh = jnp.zeros((H2, Dp), jnp.float32)
    wh = wh.at[:, :A].set(wm).at[:, A:2 * A].set(wls)
    bh = jnp.zeros((1, Dp), jnp.float32)
    bh = bh.at[:, :A].set(bm).at[:, A:2 * A].set(bls)

    tb = _default_batch_tile(B) if batch_tile is None else batch_tile
    assert B % tb == 0, "batch must be divisible by batch_tile"
    assert tb % 8 == 0 or tb == B, "batch_tile must be a multiple of 8"
    grid = (B // tb,)

    def row_spec(d):
        return pl.BlockSpec((tb, d), lambda i: (i, 0))

    def full_spec(a):
        # weights/biases: same full block every grid step (resident in VMEM)
        return pl.BlockSpec(a.shape, lambda i: (0,) * a.ndim)

    kernel = functools.partial(_policy_kernel, action_dim=A)

    flops = 2 * B * (2 * S * H1 + H1 * H2 + H2 * 2 * A)
    bytes_accessed = 4 * (2 * B * S + B * Dp
                          + 2 * S * H1 + H1 * H2 + H2 * Dp + H1 + H2 + Dp)
    cost = pl.CostEstimate(flops=flops,
                           transcendentals=B * Dp,
                           bytes_accessed=bytes_accessed)

    out = pl.pallas_call(
        kernel,
        out_shape=jax.ShapeDtypeStruct((B, Dp), jnp.float32),
        grid_spec=pltpu.PrefetchScalarGridSpec(
            num_scalar_prefetch=0,
            grid=grid,
            in_specs=[
                row_spec(S), row_spec(S),                        # state, goal
                full_spec(w1s), full_spec(w1g), full_spec(b1),   # layer 1
                full_spec(w2), full_spec(b2),                    # layer 2
                full_spec(wh), full_spec(bh),                    # fused heads
            ],
            out_specs=row_spec(Dp),
        ),
        compiler_params=pltpu.CompilerParams(
            dimension_semantics=("parallel",)),
        cost_estimate=cost,
    )(state, goal, w1s, w1g, b1, w2, b2, wh, bh)

    mean = out[:, :A]
    std = out[:, A:2 * A]
    return mean, std


def init_params(key, state_dim, action_dim, hidden_dims):
    """Deterministic synthetic init (uniform fan-in scaling, like torch).

    Weights stored as (in_features, out_features); biases as (1, out_features).
    """
    assert len(hidden_dims) == 2, "kernel implements the 2-hidden-layer config"
    dims_in = [2 * state_dim, hidden_dims[0]]
    dims_out = hidden_dims
    params = []
    keys = jax.random.split(key, 2 * (len(hidden_dims) + 2))
    k_idx = 0
    for d_in, d_out in zip(dims_in, dims_out):
        bound = 1.0 / float(d_in) ** 0.5
        params.append(jax.random.uniform(keys[k_idx], (d_in, d_out),
                                         jnp.float32, -bound, bound))
        params.append(jax.random.uniform(keys[k_idx + 1], (1, d_out),
                                         jnp.float32, -bound, bound))
        k_idx += 2
    for _ in range(2):  # mean head, log_std head
        d_in, d_out = hidden_dims[-1], action_dim
        bound = 1.0 / float(d_in) ** 0.5
        params.append(jax.random.uniform(keys[k_idx], (d_in, d_out),
                                         jnp.float32, -bound, bound))
        params.append(jax.random.uniform(keys[k_idx + 1], (1, d_out),
                                         jnp.float32, -bound, bound))
        k_idx += 2
    return tuple(params)


def reference_forward(state, goal, params):
    w1, b1, w2, b2, wm, bm, wls, bls = params
    x = jnp.concatenate([state, goal], axis=-1)
    h = jnp.maximum(x @ w1 + b1, 0.0)
    h = jnp.maximum(h @ w2 + b2, 0.0)
    mean = h @ wm + bm
    std = jnp.exp(jnp.clip(h @ wls + bls, LOG_SIG_MIN, LOG_SIG_MAX))
    return mean, std


if __name__ == "__main__":
    state_dim = 8
    action_dim = 8
    hidden_dims = [32, 32]
    batch = 256            # small, but enough rows for 2 grid steps (tile=128)

    key = jax.random.PRNGKey(0)
    k_params, k_state, k_goal = jax.random.split(key, 3)

    params = init_params(k_params, state_dim, action_dim, hidden_dims)
    state = jax.random.normal(k_state, (batch, state_dim), jnp.float32)
    goal = jax.random.normal(k_goal, (batch, state_dim), jnp.float32)

    mean, std = gaussian_policy_forward(state, goal, params)
    jax.block_until_ready((mean, std))

    # sanity check against a pure-JAX reference
    mean_ref, std_ref = reference_forward(state, goal, params)
    assert jnp.allclose(mean, mean_ref, atol=1e-5, rtol=1e-5)
    assert jnp.allclose(std, std_ref, atol=1e-5, rtol=1e-5)
    assert bool(jnp.all(std > 0))

    print("KERNEL_OK")
</pallas_src>

<mosaic_0001>
module attributes {stable_mosaic.version = 11 : i64} {
  func.func @_policy_kernel(%arg0: i32, %arg1: memref<128x8xf32, #tpu.memory_space<vmem>>, %arg2: memref<128x8xf32, #tpu.memory_space<vmem>>, %arg3: memref<8x32xf32, #tpu.memory_space<vmem>>, %arg4: memref<8x32xf32, #tpu.memory_space<vmem>>, %arg5: memref<1x32xf32, #tpu.memory_space<vmem>>, %arg6: memref<32x32xf32, #tpu.memory_space<vmem>>, %arg7: memref<1x32xf32, #tpu.memory_space<vmem>>, %arg8: memref<32x128xf32, #tpu.memory_space<vmem>>, %arg9: memref<1x128xf32, #tpu.memory_space<vmem>>, %arg10: memref<128x128xf32, #tpu.memory_space<vmem>>) attributes {dimension_semantics = [#tpu.dimension_semantics<parallel>], iteration_bounds = array<i64: 2>, scalar_prefetch = 0 : i64, scratch_operands = 0 : i64, tpu.core_type = #tpu.core_type<tc>, window_params = [{transform_indices = @transform_0, window_bounds = array<i64: 128, 8>}, {transform_indices = @transform_1, window_bounds = array<i64: 128, 8>}, {pipeline_mode = #tpu.pipeline_mode<synchronous>, transform_indices = @transform_2, window_bounds = array<i64: 8, 32>}, {pipeline_mode = #tpu.pipeline_mode<synchronous>, transform_indices = @transform_3, window_bounds = array<i64: 8, 32>}, {pipeline_mode = #tpu.pipeline_mode<synchronous>, transform_indices = @transform_4, window_bounds = array<i64: 1, 32>}, {pipeline_mode = #tpu.pipeline_mode<synchronous>, transform_indices = @transform_5, window_bounds = array<i64: 32, 32>}, {pipeline_mode = #tpu.pipeline_mode<synchronous>, transform_indices = @transform_6, window_bounds = array<i64: 1, 32>}, {pipeline_mode = #tpu.pipeline_mode<synchronous>, transform_indices = @transform_7, window_bounds = array<i64: 32, 128>}, {pipeline_mode = #tpu.pipeline_mode<synchronous>, transform_indices = @transform_8, window_bounds = array<i64: 1, 128>}, {transform_indices = @transform_9, window_bounds = array<i64: 128, 128>}]} {
    %c0 = arith.constant 0 : index
    %c0_0 = arith.constant 0 : index
    %0 = vector.load %arg1[%c0, %c0_0] : memref<128x8xf32, #tpu.memory_space<vmem>>, vector<128x8xf32>
    %c0_1 = arith.constant 0 : index
    %c0_2 = arith.constant 0 : index
    %1 = vector.load %arg3[%c0_1, %c0_2] : memref<8x32xf32, #tpu.memory_space<vmem>>, vector<8x32xf32>
    %cst = arith.constant dense<0.000000e+00> : vector<128x32xf32>
    %2 = tpu.matmul %0, %1, %cst {dimension_numbers = #tpu.dot_dimension_numbers<[1], [0], [0], [1], [0, 0, 1, 1], [], []>} : vector<128x8xf32>, vector<8x32xf32>, vector<128x32xf32> -> vector<128x32xf32>
    %c0_3 = arith.constant 0 : index
    %c0_4 = arith.constant 0 : index
    %3 = vector.load %arg2[%c0_3, %c0_4] : memref<128x8xf32, #tpu.memory_space<vmem>>, vector<128x8xf32>
    %c0_5 = arith.constant 0 : index
    %c0_6 = arith.constant 0 : index
    %4 = vector.load %arg4[%c0_5, %c0_6] : memref<8x32xf32, #tpu.memory_space<vmem>>, vector<8x32xf32>
    %cst_7 = arith.constant dense<0.000000e+00> : vector<128x32xf32>
    %5 = tpu.matmul %3, %4, %cst_7 {dimension_numbers = #tpu.dot_dimension_numbers<[1], [0], [0], [1], [0, 0, 1, 1], [], []>} : vector<128x8xf32>, vector<8x32xf32>, vector<128x32xf32> -> vector<128x32xf32>
    %6 = arith.addf %2, %5 : vector<128x32xf32>
    %c0_8 = arith.constant 0 : index
    %c0_9 = arith.constant 0 : index
    %7 = vector.load %arg5[%c0_8, %c0_9] : memref<1x32xf32, #tpu.memory_space<vmem>>, vector<1x32xf32>
    %8 = vector.broadcast %7 : vector<1x32xf32> to vector<128x32xf32>
    %9 = arith.addf %6, %8 : vector<128x32xf32>
    %cst_10 = arith.constant 0.000000e+00 : f32
    %10 = vector.broadcast %cst_10 : f32 to vector<128x32xf32>
    %11 = arith.maximumf %9, %10 : vector<128x32xf32>
    %c0_11 = arith.constant 0 : index
    %c0_12 = arith.constant 0 : index
    %12 = vector.load %arg6[%c0_11, %c0_12] : memref<32x32xf32, #tpu.memory_space<vmem>>, vector<32x32xf32>
    %cst_13 = arith.constant dense<0.000000e+00> : vector<128x32xf32>
    %13 = tpu.matmul %11, %12, %cst_13 {dimension_numbers = #tpu.dot_dimension_numbers<[1], [0], [0], [1], [0, 0, 1, 1], [], []>} : vector<128x32xf32>, vector<32x32xf32>, vector<128x32xf32> -> vector<128x32xf32>
    %c0_14 = arith.constant 0 : index
    %c0_15 = arith.constant 0 : index
    %14 = vector.load %arg7[%c0_14, %c0_15] : memref<1x32xf32, #tpu.memory_space<vmem>>, vector<1x32xf32>
    %15 = vector.broadcast %14 : vector<1x32xf32> to vector<128x32xf32>
    %16 = arith.addf %13, %15 : vector<128x32xf32>
    %cst_16 = arith.constant 0.000000e+00 : f32
    %17 = vector.broadcast %cst_16 : f32 to vector<128x32xf32>
    %18 = arith.maximumf %16, %17 : vector<128x32xf32>
    %c0_17 = arith.constant 0 : index
    %c0_18 = arith.constant 0 : index
    %19 = vector.load %arg8[%c0_17, %c0_18] : memref<32x128xf32, #tpu.memory_space<vmem>>, vector<32x128xf32>
    %cst_19 = arith.constant dense<0.000000e+00> : vector<128x128xf32>
    %20 = tpu.matmul %18, %19, %cst_19 {dimension_numbers = #tpu.dot_dimension_numbers<[1], [0], [0], [1], [0, 0, 1, 1], [], []>} : vector<128x32xf32>, vector<32x128xf32>, vector<128x128xf32> -> vector<128x128xf32>
    %c0_20 = arith.constant 0 : index
    %c0_21 = arith.constant 0 : index
    %21 = vector.load %arg9[%c0_20, %c0_21] : memref<1x128xf32, #tpu.memory_space<vmem>>, vector<1x128xf32>
    %22 = vector.broadcast %21 : vector<1x128xf32> to vector<128x128xf32>
    %23 = arith.addf %20, %22 : vector<128x128xf32>
    %cst_22 = arith.constant -2.000000e+01 : f32
    %cst_23 = arith.constant 2.000000e+00 : f32
    %24 = vector.broadcast %cst_22 : f32 to vector<128x128xf32>
    %25 = arith.maximumf %24, %23 : vector<128x128xf32>
    %26 = vector.broadcast %cst_23 : f32 to vector<128x128xf32>
    %27 = arith.minimumf %26, %25 : vector<128x128xf32>
    %28 = math.exp %27 : vector<128x128xf32>
    %29 = tpu.iota {dimensions = array<i32: 1>} : vector<128x128xi32>
    %c8_i32 = arith.constant 8 : i32
    %30 = vector.broadcast %c8_i32 : i32 to vector<128x128xi32>
    %31 = arith.cmpi sge, %29, %30 : vector<128x128xi32>
    %c16_i32 = arith.constant 16 : i32
    %32 = vector.broadcast %c16_i32 : i32 to vector<128x128xi32>
    %33 = arith.cmpi slt, %29, %32 : vector<128x128xi32>
    %34 = arith.andi %31, %33 : vector<128x128xi1>
    %35 = arith.select %34, %28, %23 : vector<128x128xi1>, vector<128x128xf32>
    %c0_24 = arith.constant 0 : index
    %c0_25 = arith.constant 0 : index
    %36 = vector.load %arg10[%c0_24, %c0_25] : memref<128x128xf32, #tpu.memory_space<vmem>>, vector<128x128xf32>
    tpu.vector_store %arg10[%c0_24, %c0_25], %35 {strides = array<i32>} : memref<128x128xf32, #tpu.memory_space<vmem>>, vector<128x128xf32>,
    return
  }
  func.func @transform_0(%arg0: i32) -> (i32, i32) {
    %c0_i32 = arith.constant 0 : i32
    %c0_i32_0 = arith.constant 0 : i32
    return %arg0, %c0_i32 : i32, i32
  }
  func.func @transform_1(%arg0: i32) -> (i32, i32) {
    %c0_i32 = arith.constant 0 : i32
    %c0_i32_0 = arith.constant 0 : i32
    return %arg0, %c0_i32 : i32, i32
  }
  func.func @transform_2(%arg0: i32) -> (i32, i32) {
    %c0_i32 = arith.constant 0 : i32
    %c0_i32_0 = arith.constant 0 : i32
    %c0_i32_1 = arith.constant 0 : i32
    return %c0_i32, %c0_i32_0 : i32, i32
  }
  func.func @transform_3(%arg0: i32) -> (i32, i32) {
    %c0_i32 = arith.constant 0 : i32
    %c0_i32_0 = arith.constant 0 : i32
    %c0_i32_1 = arith.constant 0 : i32
    return %c0_i32, %c0_i32_0 : i32, i32
  }
  func.func @transform_4(%arg0: i32) -> (i32, i32) {
    %c0_i32 = arith.constant 0 : i32
    %c0_i32_0 = arith.constant 0 : i32
    %c0_i32_1 = arith.constant 0 : i32
    return %c0_i32, %c0_i32_0 : i32, i32
  }
  func.func @transform_5(%arg0: i32) -> (i32, i32) {
    %c0_i32 = arith.constant 0 : i32
    %c0_i32_0 = arith.constant 0 : i32
    %c0_i32_1 = arith.constant 0 : i32
    return %c0_i32, %c0_i32_0 : i32, i32
  }
  func.func @transform_6(%arg0: i32) -> (i32, i32) {
    %c0_i32 = arith.constant 0 : i32
    %c0_i32_0 = arith.constant 0 : i32
    %c0_i32_1 = arith.constant 0 : i32
    return %c0_i32, %c0_i32_0 : i32, i32
  }
  func.func @transform_7(%arg0: i32) -> (i32, i32) {
    %c0_i32 = arith.constant 0 : i32
    %c0_i32_0 = arith.constant 0 : i32
    %c0_i32_1 = arith.constant 0 : i32
    return %c0_i32, %c0_i32_0 : i32, i32
  }
  func.func @transform_8(%arg0: i32) -> (i32, i32) {
    %c0_i32 = arith.constant 0 : i32
    %c0_i32_0 = arith.constant 0 : i32
    %c0_i32_1 = arith.constant 0 : i32
    return %c0_i32, %c0_i32_0 : i32, i32
  }
  func.func @transform_9(%arg0: i32) -> (i32, i32) {
    %c0_i32 = arith.constant 0 : i32
    %c0_i32_0 = arith.constant 0 : i32
    return %arg0, %c0_i32 : i32, i32
  }
}

</mosaic_0001>

<llo_original>
// kernel: tpu_custom_call.1
$region0: #{tpu_custom_call.1}
  #allocation0 [shape = 'u32[]', space=smem, size = 0x4, offset = 0x4, fixed_abs, tag = 'smem constant byte address 0x4 - core index']
  #allocation1 [shape = 'u32[144,128]{1,0:T(1,128)}', space=vmem, size = 0x12000, scoped, tag = 'internal scratch']
  %s0 = inlined_call_operand.vmem [shape: f32[256,8], index: 0, kind: input, shape index: {}]
  %s1 = inlined_call_operand.vmem [shape: f32[256,8], index: 1, kind: input, shape index: {}]
  %s2 = inlined_call_operand.vmem [shape: f32[8,32], index: 2, kind: input, shape index: {}]
  %s3 = inlined_call_operand.vmem [shape: f32[8,32], index: 3, kind: input, shape index: {}]
  %s4 = inlined_call_operand.vmem [shape: f32[1,32], index: 4, kind: input, shape index: {}]
  %s5 = inlined_call_operand.vmem [shape: f32[32,32], index: 5, kind: input, shape index: {}]
  %s6 = inlined_call_operand.vmem [shape: f32[1,32], index: 6, kind: input, shape index: {}]
  %s7 = inlined_call_operand.vmem [shape: f32[32,128], index: 7, kind: input, shape index: {}]
  %s8 = inlined_call_operand.vmem [shape: f32[1,128], index: 8, kind: input, shape index: {}]
  %s9 = inlined_call_operand.hbm [shape: f32[256,128], index: 9, kind: output, shape index: {}]
  %s10 = sld [smem:[#allocation0]]
  $region69: #{tpu_custom_call.1} parent=0
    _
  %s12 = ssub.s32 1, %s10
  %s13 = scalar_select 0, %s12, %s10
  $region1: #{tpu_custom_call.1} parent=0
    #allocation2 [shape = 'u8[131072]{0}', space=vmem, size = 0x20000, scoped, tag = 'output window, operand 0']
    #allocation3 [shape = 's32[2]{0}', space=sflag, size = 0x8, scoped, tag = 'scoped memory for tpu_custom_call.1']
    %14 = vsyncpa [#allocation3], 0
    %s15 = scalar_lea.sflag [#allocation3], 1
    %16 = vsyncpa %s15, 0
    loop: start=0, step=1, limit=4
    $region2: #{tpu_custom_call.1} parent=1 // loop_pre_header
      _
    $region3: #{tpu_custom_call.1} parent=1 // loop_header
      %s18 = sphi 0, %s22
      %p19 = scmp.ge.s32.totalorder %s18, 4
      %s28 = sphi 0, %s30
      %s31 = sphi 0, %s28
      %s32 = sphi 0, %s31
      %s48 = sphi 0, %s32
      %s54 = sphi 0, %s56
      %s57 = sphi 0, %s54
      %s58 = sphi 0, %s57
      %s74 = sphi 0, %s58
      %s78 = sphi 0, %s78
      %s80 = sphi 0, %s78
      %s81 = sphi 0, %s80
      %s95 = sphi 0, %s81
      %s99 = sphi 0, %s99
      %s101 = sphi 0, %s99
      %s102 = sphi 0, %s101
      %s116 = sphi 0, %s102
      %s120 = sphi 0, %s120
      %s122 = sphi 0, %s120
      %s123 = sphi 0, %s122
      %s137 = sphi 0, %s123
      %s141 = sphi 0, %s141
      %s143 = sphi 0, %s141
      %s144 = sphi 0, %s143
      %s158 = sphi 0, %s144
      %s162 = sphi 0, %s162
      %s164 = sphi 0, %s162
      %s165 = sphi 0, %s164
      %s179 = sphi 0, %s165
      %s183 = sphi 0, %s183
      %s185 = sphi 0, %s183
      %s186 = sphi 0, %s185
      %s200 = sphi 0, %s186
      %s204 = sphi 0, %s204
      %s206 = sphi 0, %s204
      %s207 = sphi 0, %s206
      %s221 = sphi 0, %s207
      %s227 = sphi 0, %s229
      %s230 = sphi 0, %s227
      %s231 = sphi 0, %s230
      %s247 = sphi 0, %s231
    $region4: #{tpu_custom_call.1} parent=1 // loop_header_branch
      %21 = sbr.rel (%p19) target = $region8
    $region5: #{tpu_custom_call.1} parent=1 // loop_body
      %s23 = ssub.s32 %s18, 1
      %s24 = ssub.s32 %s18, 2
      %s25 = sadd.s32 %s18, 1
      %s26 = ssub.s32 %s18, %s25
      %p27 = scmp.eq.s32.totalorder %s26, 0
      %s29 = sadd.s32 %s28, 1
      %s30 = scalar_select %p27, %s28, %s29
      %p33 = pneg %p27
      %p34 = scmp.eq.s32.totalorder %s18, 1
      %p35 = por %p33, %p34
      %p36 = scmp.ne.s32.totalorder %s28, %s31
      %p37 = scmp.eq.s32.totalorder %s18, 0
      %p38 = por %p36, %p37
      %p39 = scmp.ne.s32.totalorder %s28, %s31
      %p40 = scmp.eq.s32.totalorder %s23, 1
      %p41 = por %p39, %p40
      %p42 = scmp.ne.s32.totalorder %s31, %s32
      %p43 = scmp.eq.s32.totalorder %s23, 0
      %p44 = por %p42, %p43
      %p45 = scmp.ne.s32.totalorder %s31, %s32
      %p46 = scmp.eq.s32.totalorder %s24, 1
      %p47 = por %p45, %p46
      %p49 = scmp.ne.s32.totalorder %s32, %s48
      %p50 = scmp.eq.s32.totalorder %s24, 0
      %p51 = por %p49, %p50
      %s52 = ssub.s32 %s18, %s25
      %p53 = scmp.eq.s32.totalorder %s52, 0
      %s55 = sadd.s32 %s54, 1
      %s56 = scalar_select %p53, %s54, %s55
      %p59 = pneg %p53
      %p60 = scmp.eq.s32.totalorder %s18, 1
      %p61 = por %p59, %p60
      %p62 = scmp.ne.s32.totalorder %s54, %s57
      %p63 = scmp.eq.s32.totalorder %s18, 0
      %p64 = por %p62, %p63
      %p65 = scmp.ne.s32.totalorder %s54, %s57
      %p66 = scmp.eq.s32.totalorder %s23, 1
      %p67 = por %p65, %p66
      %p68 = scmp.ne.s32.totalorder %s57, %s58
      %p69 = scmp.eq.s32.totalorder %s23, 0
      %p70 = por %p68, %p69
      %p71 = scmp.ne.s32.totalorder %s57, %s58
      %p72 = scmp.eq.s32.totalorder %s24, 1
      %p73 = por %p71, %p72
      %p75 = scmp.ne.s32.totalorder %s58, %s74
      %p76 = scmp.eq.s32.totalorder %s24, 0
      %p77 = por %p75, %p76
      %s79 = sadd.s32 %s78, 1
      %p82 = scmp.eq.s32.totalorder %s18, 1
      %p83 = scmp.ne.s32.totalorder %s78, %s80
      %p84 = scmp.eq.s32.totalorder %s18, 0
      %p85 = por %p83, %p84
      %p86 = scmp.ne.s32.totalorder %s78, %s80
      %p87 = scmp.eq.s32.totalorder %s23, 1
      %p88 = por %p86, %p87
      %p89 = scmp.ne.s32.totalorder %s80, %s81
      %p90 = scmp.eq.s32.totalorder %s23, 0
      %p91 = por %p89, %p90
      %p92 = scmp.ne.s32.totalorder %s80, %s81
      %p93 = scmp.eq.s32.totalorder %s24, 1
      %p94 = por %p92, %p93
      %p96 = scmp.ne.s32.totalorder %s81, %s95
      %p97 = scmp.eq.s32.totalorder %s24, 0
      %p98 = por %p96, %p97
      %s100 = sadd.s32 %s99, 1
      %p103 = scmp.eq.s32.totalorder %s18, 1
      %p104 = scmp.ne.s32.totalorder %s99, %s101
      %p105 = scmp.eq.s32.totalorder %s18, 0
      %p106 = por %p104, %p105
      %p107 = scmp.ne.s32.totalorder %s99, %s101
      %p108 = scmp.eq.s32.totalorder %s23, 1
      %p109 = por %p107, %p108
      %p110 = scmp.ne.s32.totalorder %s101, %s102
      %p111 = scmp.eq.s32.totalorder %s23, 0
      %p112 = por %p110, %p111
      %p113 = scmp.ne.s32.totalorder %s101, %s102
      %p114 = scmp.eq.s32.totalorder %s24, 1
      %p115 = por %p113, %p114
      %p117 = scmp.ne.s32.totalorder %s102, %s116
      %p118 = scmp.eq.s32.totalorder %s24, 0
      %p119 = por %p117, %p118
      %s121 = sadd.s32 %s120, 1
      %p124 = scmp.eq.s32.totalorder %s18, 1
      %p125 = scmp.ne.s32.totalorder %s120, %s122
      %p126 = scmp.eq.s32.totalorder %s18, 0
      %p127 = por %p125, %p126
      %p128 = scmp.ne.s32.totalorder %s120, %s122
      %p129 = scmp.eq.s32.totalorder %s23, 1
      %p130 = por %p128, %p129
      %p131 = scmp.ne.s32.totalorder %s122, %s123
      %p132 = scmp.eq.s32.totalorder %s23, 0
      %p133 = por %p131, %p132
      %p134 = scmp.ne.s32.totalorder %s122, %s123
      %p135 = scmp.eq.s32.totalorder %s24, 1
      %p136 = por %p134, %p135
      %p138 = scmp.ne.s32.totalorder %s123, %s137
      %p139 = scmp.eq.s32.totalorder %s24, 0
      %p140 = por %p138, %p139
      %s142 = sadd.s32 %s141, 1
      %p145 = scmp.eq.s32.totalorder %s18, 1
      %p146 = scmp.ne.s32.totalorder %s141, %s143
      %p147 = scmp.eq.s32.totalorder %s18, 0
      %p148 = por %p146, %p147
      %p149 = scmp.ne.s32.totalorder %s141, %s143
      %p150 = scmp.eq.s32.totalorder %s23, 1
      %p151 = por %p149, %p150
      %p152 = scmp.ne.s32.totalorder %s143, %s144
      %p153 = scmp.eq.s32.totalorder %s23, 0
      %p154 = por %p152, %p153
      %p155 = scmp.ne.s32.totalorder %s143, %s144
      %p156 = scmp.eq.s32.totalorder %s24, 1
      %p157 = por %p155, %p156
      %p159 = scmp.ne.s32.totalorder %s144, %s158
      %p160 = scmp.eq.s32.totalorder %s24, 0
      %p161 = por %p159, %p160
      %s163 = sadd.s32 %s162, 1
      %p166 = scmp.eq.s32.totalorder %s18, 1
      %p167 = scmp.ne.s32.totalorder %s162, %s164
      %p168 = scmp.eq.s32.totalorder %s18, 0
      %p169 = por %p167, %p168
      %p170 = scmp.ne.s32.totalorder %s162, %s164
      %p171 = scmp.eq.s32.totalorder %s23, 1
      %p172 = por %p170, %p171
      %p173 = scmp.ne.s32.totalorder %s164, %s165
      %p174 = scmp.eq.s32.totalorder %s23, 0
      %p175 = por %p173, %p174
      %p176 = scmp.ne.s32.totalorder %s164, %s165
      %p177 = scmp.eq.s32.totalorder %s24, 1
      %p178 = por %p176, %p177
      %p180 = scmp.ne.s32.totalorder %s165, %s179
      %p181 = scmp.eq.s32.totalorder %s24, 0
      %p182 = por %p180, %p181
      %s184 = sadd.s32 %s183, 1
      %p187 = scmp.eq.s32.totalorder %s18, 1
      %p188 = scmp.ne.s32.totalorder %s183, %s185
      %p189 = scmp.eq.s32.totalorder %s18, 0
      %p190 = por %p188, %p189
      %p191 = scmp.ne.s32.totalorder %s183, %s185
      %p192 = scmp.eq.s32.totalorder %s23, 1
      %p193 = por %p191, %p192
      %p194 = scmp.ne.s32.totalorder %s185, %s186
      %p195 = scmp.eq.s32.totalorder %s23, 0
      %p196 = por %p194, %p195
      %p197 = scmp.ne.s32.totalorder %s185, %s186
      %p198 = scmp.eq.s32.totalorder %s24, 1
      %p199 = por %p197, %p198
      %p201 = scmp.ne.s32.totalorder %s186, %s200
      %p202 = scmp.eq.s32.totalorder %s24, 0
      %p203 = por %p201, %p202
      %s205 = sadd.s32 %s204, 1
      %p208 = scmp.eq.s32.totalorder %s18, 1
      %p209 = scmp.ne.s32.totalorder %s204, %s206
      %p210 = scmp.eq.s32.totalorder %s18, 0
      %p211 = por %p209, %p210
      %p212 = scmp.ne.s32.totalorder %s204, %s206
      %p213 = scmp.eq.s32.totalorder %s23, 1
      %p214 = por %p212, %p213
      %p215 = scmp.ne.s32.totalorder %s206, %s207
      %p216 = scmp.eq.s32.totalorder %s23, 0
      %p217 = por %p215, %p216
      %p218 = scmp.ne.s32.totalorder %s206, %s207
      %p219 = scmp.eq.s32.totalorder %s24, 1
      %p220 = por %p218, %p219
      %p222 = scmp.ne.s32.totalorder %s207, %s221
      %p223 = scmp.eq.s32.totalorder %s24, 0
      %p224 = por %p222, %p223
      %s225 = ssub.s32 %s18, %s25
      %p226 = scmp.eq.s32.totalorder %s225, 0
      %s228 = sadd.s32 %s227, 1
      %s229 = scalar_select %p226, %s227, %s228
      %p232 = pneg %p226
      %p233 = scmp.eq.s32.totalorder %s18, 1
      %p234 = por %p232, %p233
      %p235 = scmp.ne.s32.totalorder %s227, %s230
      %p236 = scmp.eq.s32.totalorder %s18, 0
      %p237 = por %p235, %p236
      %p238 = scmp.ne.s32.totalorder %s227, %s230
      %p239 = scmp.eq.s32.totalorder %s23, 1
      %p240 = por %p238, %p239
      %p241 = scmp.ne.s32.totalorder %s230, %s231
      %p242 = scmp.eq.s32.totalorder %s23, 0
      %p243 = por %p241, %p242
      %p244 = scmp.ne.s32.totalorder %s230, %s231
      %p245 = scmp.eq.s32.totalorder %s24, 1
      %p246 = por %p244, %p245
      %p248 = scmp.ne.s32.totalorder %s231, %s247
      %p249 = scmp.eq.s32.totalorder %s24, 0
      %p250 = por %p248, %p249
      %p251 = scmp.le.s32.totalorder 1, %s18
      %p252 = scmp.lt.s32.totalorder %s18, 3
      %p253 = pnand %p251, %p252
      %p254 = pneg %p253
      // Predicated region
      $region9: #{tpu_custom_call.1} parent=5 // pred_check
        _
      $region10: #{tpu_custom_call.1} parent=5 // pred_check_branch
        %256 = sbr.rel (%p253) target = $region12
      $region11: #{tpu_custom_call.1} parent=5 // pred_region
        %s257 = ssub.s32 %s18, 1
        // Predicated region
        $region13: #{tpu_custom_call.1} parent=11 // pred_check
          %p258 = pneg %p91
        $region14: #{tpu_custom_call.1} parent=11 // pred_check_branch
          %260 = sbr.rel (%p258) target = $region16
        $region15: #{tpu_custom_call.1} parent=11 // pred_region
          _
        $region16: #{tpu_custom_call.1} parent=11 // pred_fallthru
          _
        // Predicated region
        $region17: #{tpu_custom_call.1} parent=11 // pred_check
          %p261 = pneg %p112
        $region18: #{tpu_custom_call.1} parent=11 // pred_check_branch
          %263 = sbr.rel (%p261) target = $region20
        $region19: #{tpu_custom_call.1} parent=11 // pred_region
          _
        $region20: #{tpu_custom_call.1} parent=11 // pred_fallthru
          _
        // Predicated region
        $region21: #{tpu_custom_call.1} parent=11 // pred_check
          %p264 = pneg %p133
        $region22: #{tpu_custom_call.1} parent=11 // pred_check_branch
          %266 = sbr.rel (%p264) target = $region24
        $region23: #{tpu_custom_call.1} parent=11 // pred_region
          _
        $region24: #{tpu_custom_call.1} parent=11 // pred_fallthru
          _
        // Predicated region
        $region25: #{tpu_custom_call.1} parent=11 // pred_check
          %p267 = pneg %p154
        $region26: #{tpu_custom_call.1} parent=11 // pred_check_branch
          %269 = sbr.rel (%p267) target = $region28
        $region27: #{tpu_custom_call.1} parent=11 // pred_region
          _
        $region28: #{tpu_custom_call.1} parent=11 // pred_fallthru
          _
        // Predicated region
        $region29: #{tpu_custom_call.1} parent=11 // pred_check
          %p270 = pneg %p175
        $region30: #{tpu_custom_call.1} parent=11 // pred_check_branch
          %272 = sbr.rel (%p270) target = $region32
        $region31: #{tpu_custom_call.1} parent=11 // pred_region
          _
        $region32: #{tpu_custom_call.1} parent=11 // pred_fallthru
          _
        // Predicated region
        $region33: #{tpu_custom_call.1} parent=11 // pred_check
          %p273 = pneg %p196
        $region34: #{tpu_custom_call.1} parent=11 // pred_check_branch
          %275 = sbr.rel (%p273) target = $region36
        $region35: #{tpu_custom_call.1} parent=11 // pred_region
          _
        $region36: #{tpu_custom_call.1} parent=11 // pred_fallthru
          _
        // Predicated region
        $region37: #{tpu_custom_call.1} parent=11 // pred_check
          %p276 = pneg %p217
        $region38: #{tpu_custom_call.1} parent=11 // pred_check_branch
          %278 = sbr.rel (%p276) target = $region40
        $region39: #{tpu_custom_call.1} parent=11 // pred_region
          _
        $region40: #{tpu_custom_call.1} parent=11 // pred_fallthru
          _
      $region12: #{tpu_custom_call.1} parent=5 // pred_fallthru
        _
      %p279 = scmp.lt.s32.totalorder %s18, 2
      // Predicated region
      $region41: #{tpu_custom_call.1} parent=5 // pred_check
        %p280 = pneg %p279
      $region42: #{tpu_custom_call.1} parent=5 // pred_check_branch
        %282 = sbr.rel (%p280) target = $region44
      $region43: #{tpu_custom_call.1} parent=5 // pred_region
        // Predicated region
        $region45: #{tpu_custom_call.1} parent=43 // pred_check
          %p283 = pneg %p38
        $region46: #{tpu_custom_call.1} parent=43 // pred_check_branch
          %285 = sbr.rel (%p283) target = $region48
        $region47: #{tpu_custom_call.1} parent=43 // pred_region
          %s286 = smul.u32 16, %s18
          %p287 = scmp.lt.s32.totalorder %s286, 31
          %s288 = scalar_select %p287, %s286, 31
          %s289 = smul.addr %s288, 8
          %s290 = scalar_lea.vmem %s0, %s289
          %s291 = smul.u32 16, %s18
        $region48: #{tpu_custom_call.1} parent=43 // pred_fallthru
          _
        // Predicated region
        $region49: #{tpu_custom_call.1} parent=43 // pred_check
          %p292 = pneg %p64
        $region50: #{tpu_custom_call.1} parent=43 // pred_check_branch
          %294 = sbr.rel (%p292) target = $region52
        $region51: #{tpu_custom_call.1} parent=43 // pred_region
          %s295 = smul.u32 16, %s18
          %p296 = scmp.lt.s32.totalorder %s295, 31
          %s297 = scalar_select %p296, %s295, 31
          %s298 = smul.addr %s297, 8
          %s299 = scalar_lea.vmem %s1, %s298
          %s300 = smul.u32 16, %s18
        $region52: #{tpu_custom_call.1} parent=43 // pred_fallthru
          _
      $region44: #{tpu_custom_call.1} parent=5 // pred_fallthru
        _
      %p301 = scmp.le.s32.totalorder 1, %s18
      %p302 = scmp.lt.s32.totalorder %s18, 3
      %p303 = pnand %p301, %p302
      %p304 = pneg %p303
      // Predicated region
      $region53: #{tpu_custom_call.1} parent=5 // pred_check
        _
      $region54: #{tpu_custom_call.1} parent=5 // pred_check_branch
        %306 = sbr.rel (%p303) target = $region56
      $region55: #{tpu_custom_call.1} parent=5 // pred_region
        %s307 = ssub.s32 %s18, 1
        %s308 = smul.u32 16, %s23
        %p309 = scmp.lt.s32.totalorder %s308, 31
        %s310 = scalar_select %p309, %s308, 31
        %s311 = smul.addr %s310, 8
        %s312 = scalar_lea.vmem %s0, %s311
        %p313 = pneg %p44
        %p314 = pneg %p41
        %s315 = smul.u32 16, %s23
        %p316 = scmp.lt.s32.totalorder %s315, 31
        %s317 = scalar_select %p316, %s315, 31
        %s318 = smul.addr %s317, 8
        %s319 = scalar_lea.vmem %s1, %s318
        %p320 = pneg %p70
        %p321 = pneg %p67
        %p322 = pneg %p91
        %p323 = pneg %p88
        %p324 = pneg %p112
        %p325 = pneg %p109
        %p326 = pneg %p133
        %p327 = pneg %p130
        %p328 = pneg %p154
        %p329 = pneg %p151
        %p330 = pneg %p175
        %p331 = pneg %p172
        %p332 = pneg %p196
        %p333 = pneg %p193
        %p334 = pneg %p217
        %p335 = pneg %p214
        %p336 = pneg %p243
        %p337 = pneg %p240
        %s338 = sand.u32 %s230, 1
        %s339 = scalar_lea.sflag [#allocation3], %s338
        %s340 = sand.u32 %s230, 1
        %s341 = smul.addr %s340, 128
        %s342 = scalar_lea.vmem [#allocation2], %s341
        %s343 = smul.u32 16, %s23
        %p344 = scmp.lt.s32.totalorder %s343, 31
        %s345 = scalar_select %p344, %s343, 31
        %s346 = smul.addr %s345, 8
        %s347 = scalar_lea.vmem %s0, %s346
        %s348 = smul.u32 16, %s23
        %s349 = smul.u32 16, %s23
        %p350 = scmp.lt.s32.totalorder %s349, 31
        %s351 = scalar_select %p350, %s349, 31
        %s352 = smul.addr %s351, 8
        %s353 = scalar_lea.vmem %s1, %s352
        %s354 = smul.u32 16, %s23
        %s355 = smul.u32 16, %s23
        %v356 = vld [vmem:[%s347] sm:$0xff]
        %v357 = vld [vmem:[%s347 + $0x8] sm:$0xff]
        %v358 = vld [vmem:[%s347 + $0x10] sm:$0xff]
        %v359 = vld [vmem:[%s347 + $0x18] sm:$0xff]
        %v360 = vld [vmem:[%s347 + $0x20] sm:$0xff]
        %v361 = vld [vmem:[%s347 + $0x28] sm:$0xff]
        %v362 = vld [vmem:[%s347 + $0x30] sm:$0xff]
        %v363 = vld [vmem:[%s347 + $0x38] sm:$0xff]
        %v364 = vld [vmem:[%s347 + $0x40] sm:$0xff]
        %v365 = vld [vmem:[%s347 + $0x48] sm:$0xff]
        %v366 = vld [vmem:[%s347 + $0x50] sm:$0xff]
        %v367 = vld [vmem:[%s347 + $0x58] sm:$0xff]
        %v368 = vld [vmem:[%s347 + $0x60] sm:$0xff]
        %v369 = vld [vmem:[%s347 + $0x68] sm:$0xff]
        %v370 = vld [vmem:[%s347 + $0x70] sm:$0xff]
        %v371 = vld [vmem:[%s347 + $0x78] sm:$0xff]
        %v372 = vld [vmem:[%s2] sm:$0xff]
        %v373 = vld [vmem:[%s353] sm:$0xff]
        %v374 = vld [vmem:[%s353 + $0x8] sm:$0xff]
        %v375 = vld [vmem:[%s353 + $0x10] sm:$0xff]
        %v376 = vld [vmem:[%s353 + $0x18] sm:$0xff]
        %v377 = vld [vmem:[%s353 + $0x20] sm:$0xff]
        %v378 = vld [vmem:[%s353 + $0x28] sm:$0xff]
        %v379 = vld [vmem:[%s353 + $0x30] sm:$0xff]
        %v380 = vld [vmem:[%s353 + $0x38] sm:$0xff]
        %v381 = vld [vmem:[%s353 + $0x40] sm:$0xff]
        %v382 = vld [vmem:[%s353 + $0x48] sm:$0xff]
        %v383 = vld [vmem:[%s353 + $0x50] sm:$0xff]
        %v384 = vld [vmem:[%s353 + $0x58] sm:$0xff]
        %v385 = vld [vmem:[%s353 + $0x60] sm:$0xff]
        %v386 = vld [vmem:[%s353 + $0x68] sm:$0xff]
        %v387 = vld [vmem:[%s353 + $0x70] sm:$0xff]
        %v388 = vld [vmem:[%s353 + $0x78] sm:$0xff]
        %v389 = vld [vmem:[%s3] sm:$0xff]
        %vm390 = vcmask 64512
        %v392 = vsel %vm390, %v373, 0
        %v395 = vsel %vm390, %v374, 0
        %v398 = vsel %vm390, %v375, 0
        %v401 = vsel %vm390, %v376, 0
        %v404 = vsel %vm390, %v377, 0
        %v407 = vsel %vm390, %v378, 0
        %v410 = vsel %vm390, %v379, 0
        %v413 = vsel %vm390, %v380, 0
        %v416 = vsel %vm390, %v381, 0
        %v419 = vsel %vm390, %v382, 0
        %v422 = vsel %vm390, %v383, 0
        %v425 = vsel %vm390, %v384, 0
        %v428 = vsel %vm390, %v385, 0
        %v431 = vsel %vm390, %v386, 0
        %v434 = vsel %vm390, %v387, 0
        %v437 = vsel %vm390, %v388, 0
        %439 = vmatprep.subr.mxu0 0.0
        %440 = vmatpush1.msra.mxu0 %v389
        %441 = vmatprep.subr.mxu0 0.0
        %442 = vmatpush1.msra.mxu0 0.0
        %443 = vmatprep.subr.mxu0 0.0
        %444 = vmatpush1.msra.mxu0 0.0
        %445 = vmatprep.subr.mxu0 0.0
        %446 = vmatpush1.msra.mxu0 0.0
        %447 = vmatprep.subr.mxu0 0.0
        %448 = vmatpush1.msra.mxu0 0.0
        %449 = vmatprep.subr.mxu0 0.0
        %450 = vmatpush1.msra.mxu0 0.0
        %451 = vmatprep.subr.mxu0 0.0
        %452 = vmatpush1.msra.mxu0 0.0
        %453 = vmatprep.subr.mxu0 0.0
        %454 = vmatpush1.msra.mxu0 0.0
        %455 = vmatprep.subr.mxu0 0.0
        %456 = vmatpush1.msra.mxu0 0.0
        %457 = vmatprep.subr.mxu0 0.0
        %458 = vmatpush1.msra.mxu0 0.0
        %459 = vmatprep.subr.mxu0 0.0
        %460 = vmatpush1.msra.mxu0 0.0
        %461 = vmatprep.subr.mxu0 0.0
        %462 = vmatpush1.msra.mxu0 0.0
        %463 = vmatprep.subr.mxu0 0.0
        %464 = vmatpush1.msra.mxu0 0.0
        %465 = vmatprep.subr.mxu0 0.0
        %466 = vmatpush1.msra.mxu0 0.0
        %467 = vmatprep.subr.mxu0 0.0
        %468 = vmatpush1.msra.mxu0 0.0
        %469 = vmatprep.subr.mxu0 0.0
        %470 = vmatpush1.msra.mxu0 0.0
        %471 = vmatprep.subr.mxu0 0.0
        %472 = vmatpush1.msra.mxu0 0.0
        %473 = vmatprep.subr.mxu0 0.0
        %474 = vmatpush1.msra.mxu0 0.0
        %475 = vmatprep.subr.mxu0 0.0
        %476 = vmatpush1.msra.mxu0 0.0
        %477 = vmatprep.subr.mxu0 0.0
        %478 = vmatpush1.msra.mxu0 0.0
        %479 = vmatprep.subr.mxu0 0.0
        %480 = vmatpush1.msra.mxu0 0.0
        %481 = vmatprep.subr.mxu0 0.0
        %482 = vmatpush1.msra.mxu0 0.0
        %483 = vmatprep.subr.mxu0 0.0
        %484 = vmatpush1.msra.mxu0 0.0
        %485 = vmatprep.subr.mxu0 0.0
        %486 = vmatpush1.msra.mxu0 0.0
        %487 = vmatprep.subr.mxu0 0.0
        %488 = vmatpush1.msra.mxu0 0.0
        %489 = vmatprep.subr.mxu0 0.0
        %490 = vmatpush1.msra.mxu0 0.0
        %491 = vmatprep.subr.mxu0 0.0
        %492 = vmatpush1.msra.mxu0 0.0
        %493 = vmatprep.subr.mxu0 0.0
        %494 = vmatpush1.msra.mxu0 0.0
        %495 = vmatprep.subr.mxu0 0.0
        %496 = vmatpush1.msra.mxu0 0.0
        %497 = vmatprep.subr.mxu0 0.0
        %498 = vmatpush1.msra.mxu0 0.0
        %499 = vmatprep.subr.mxu0 0.0
        %500 = vmatpush1.msra.mxu0 0.0
        %501 = vmatprep.subr.mxu0 0.0
        %502 = vmatpush1.msra.mxu0 0.0
        %503 = vmatprep.mubr.f32.mxu0 0.0
        %504 = vmatmul.mubr.f32.gmra.mrb[0].mxu0 %v392
        %v505 = vpop.f32.mrb[0].mxu0
        %v506 = vadd.f32 0.0, %v505
        %v507 = vpop.f32.mrb[0].mxu0
        %508 = vmatprep.mubr.f32.mxu0 0.0
        %509 = vmatmul.mubr.f32.gmra.mrb[0].mxu0 %v395
        %v510 = vpop.f32.mrb[0].mxu0
        %v511 = vadd.f32 0.0, %v510
        %v512 = vpop.f32.mrb[0].mxu0
        %513 = vmatprep.mubr.f32.mxu0 0.0
        %514 = vmatmul.mubr.f32.gmra.mrb[0].mxu0 %v398
        %v515 = vpop.f32.mrb[0].mxu0
        %v516 = vadd.f32 0.0, %v515
        %v517 = vpop.f32.mrb[0].mxu0
        %518 = vmatprep.mubr.f32.mxu0 0.0
        %519 = vmatmul.mubr.f32.gmra.mrb[0].mxu0 %v401
        %v520 = vpop.f32.mrb[0].mxu0
        %v521 = vadd.f32 0.0, %v520
        %v522 = vpop.f32.mrb[0].mxu0
        %523 = vmatprep.mubr.f32.mxu0 0.0
        %524 = vmatmul.mubr.f32.gmra.mrb[0].mxu0 %v404
        %v525 = vpop.f32.mrb[0].mxu0
        %v526 = vadd.f32 0.0, %v525
        %v527 = vpop.f32.mrb[0].mxu0
        %528 = vmatprep.mubr.f32.mxu0 0.0
        %529 = vmatmul.mubr.f32.gmra.mrb[0].mxu0 %v407
        %v530 = vpop.f32.mrb[0].mxu0
        %v531 = vadd.f32 0.0, %v530
        %v532 = vpop.f32.mrb[0].mxu0
        %533 = vmatprep.mubr.f32.mxu0 0.0
        %534 = vmatmul.mubr.f32.gmra.mrb[0].mxu0 %v410
        %v535 = vpop.f32.mrb[0].mxu0
        %v536 = vadd.f32 0.0, %v535
        %v537 = vpop.f32.mrb[0].mxu0
        %538 = vmatprep.mubr.f32.mxu0 0.0
        %539 = vmatmul.mubr.f32.gmra.mrb[0].mxu0 %v413
        %v540 = vpop.f32.mrb[0].mxu0
        %v541 = vadd.f32 0.0, %v540
        %v542 = vpop.f32.mrb[0].mxu0
        %543 = vmatprep.mubr.f32.mxu0 0.0
        %544 = vmatmul.mubr.f32.gmra.mrb[0].mxu0 %v416
        %v545 = vpop.f32.mrb[0].mxu0
        %v546 = vadd.f32 0.0, %v545
        %v547 = vpop.f32.mrb[0].mxu0
        %548 = vmatprep.mubr.f32.mxu0 0.0
        %549 = vmatmul.mubr.f32.gmra.mrb[0].mxu0 %v419
        %v550 = vpop.f32.mrb[0].mxu0
        %v551 = vadd.f32 0.0, %v550
        %v552 = vpop.f32.mrb[0].mxu0
        %553 = vmatprep.mubr.f32.mxu0 0.0
        %554 = vmatmul.mubr.f32.gmra.mrb[0].mxu0 %v422
        %v555 = vpop.f32.mrb[0].mxu0
        %v556 = vadd.f32 0.0, %v555
        %v557 = vpop.f32.mrb[0].mxu0
        %558 = vmatprep.mubr.f32.mxu0 0.0
        %559 = vmatmul.mubr.f32.gmra.mrb[0].mxu0 %v425
        %v560 = vpop.f32.mrb[0].mxu0
        %v561 = vadd.f32 0.0, %v560
        %v562 = vpop.f32.mrb[0].mxu0
        %563 = vmatprep.mubr.f32.mxu0 0.0
        %564 = vmatmul.mubr.f32.gmra.mrb[0].mxu0 %v428
        %v565 = vpop.f32.mrb[0].mxu0
        %v566 = vadd.f32 0.0, %v565
        %v567 = vpop.f32.mrb[0].mxu0
        %568 = vmatprep.mubr.f32.mxu0 0.0
        %569 = vmatmul.mubr.f32.gmra.mrb[0].mxu0 %v431
        %v570 = vpop.f32.mrb[0].mxu0
        %v571 = vadd.f32 0.0, %v570
        %v572 = vpop.f32.mrb[0].mxu0
        %573 = vmatprep.mubr.f32.mxu0 0.0
        %574 = vmatmul.mubr.f32.gmra.mrb[0].mxu0 %v434
        %v575 = vpop.f32.mrb[0].mxu0
        %v576 = vadd.f32 0.0, %v575
        %v577 = vpop.f32.mrb[0].mxu0
        %578 = vmatprep.mubr.f32.mxu0 0.0
        %579 = vmatmul.mubr.f32.gmra.mrb[0].mxu0 %v437
        %v580 = vpop.f32.mrb[0].mxu0
        %v581 = vadd.f32 0.0, %v580
        %v582 = vpop.f32.mrb[0].mxu0
        %583 = vdwg.mxu0
        %v585 = vsel %vm390, %v356, 0
        %v588 = vsel %vm390, %v357, 0
        %v591 = vsel %vm390, %v358, 0
        %v594 = vsel %vm390, %v359, 0
        %v597 = vsel %vm390, %v360, 0
        %v600 = vsel %vm390, %v361, 0
        %v603 = vsel %vm390, %v362, 0
        %v606 = vsel %vm390, %v363, 0
        %v609 = vsel %vm390, %v364, 0
        %v612 = vsel %vm390, %v365, 0
        %v615 = vsel %vm390, %v366, 0
        %v618 = vsel %vm390, %v367, 0
        %v621 = vsel %vm390, %v368, 0
        %v624 = vsel %vm390, %v369, 0
        %v627 = vsel %vm390, %v370, 0
        %v630 = vsel %vm390, %v371, 0
        %632 = vmatprep.subr.mxu0 0.0
        %633 = vmatpush1.msra.mxu0 %v372
        %634 = vmatprep.subr.mxu0 0.0
        %635 = vmatpush1.msra.mxu0 0.0
        %636 = vmatprep.subr.mxu0 0.0
        %637 = vmatpush1.msra.mxu0 0.0
        %638 = vmatprep.subr.mxu0 0.0
        %639 = vmatpush1.msra.mxu0 0.0
        %640 = vmatprep.subr.mxu0 0.0
        %641 = vmatpush1.msra.mxu0 0.0
        %642 = vmatprep.subr.mxu0 0.0
        %643 = vmatpush1.msra.mxu0 0.0
        %644 = vmatprep.subr.mxu0 0.0
        %645 = vmatpush1.msra.mxu0 0.0
        %646 = vmatprep.subr.mxu0 0.0
        %647 = vmatpush1.msra.mxu0 0.0
        %648 = vmatprep.subr.mxu0 0.0
        %649 = vmatpush1.msra.mxu0 0.0
        %650 = vmatprep.subr.mxu0 0.0
        %651 = vmatpush1.msra.mxu0 0.0
        %652 = vmatprep.subr.mxu0 0.0
        %653 = vmatpush1.msra.mxu0 0.0
        %654 = vmatprep.subr.mxu0 0.0
        %655 = vmatpush1.msra.mxu0 0.0
        %656 = vmatprep.subr.mxu0 0.0
        %657 = vmatpush1.msra.mxu0 0.0
        %658 = vmatprep.subr.mxu0 0.0
        %659 = vmatpush1.msra.mxu0 0.0
        %660 = vmatprep.subr.mxu0 0.0
        %661 = vmatpush1.msra.mxu0 0.0
        %662 = vmatprep.subr.mxu0 0.0
        %663 = vmatpush1.msra.mxu0 0.0
        %664 = vmatprep.subr.mxu0 0.0
        %665 = vmatpush1.msra.mxu0 0.0
        %666 = vmatprep.subr.mxu0 0.0
        %667 = vmatpush1.msra.mxu0 0.0
        %668 = vmatprep.subr.mxu0 0.0
        %669 = vmatpush1.msra.mxu0 0.0
        %670 = vmatprep.subr.mxu0 0.0
        %671 = vmatpush1.msra.mxu0 0.0
        %672 = vmatprep.subr.mxu0 0.0
        %673 = vmatpush1.msra.mxu0 0.0
        %674 = vmatprep.subr.mxu0 0.0
        %675 = vmatpush1.msra.mxu0 0.0
        %676 = vmatprep.subr.mxu0 0.0
        %677 = vmatpush1.msra.mxu0 0.0
        %678 = vmatprep.subr.mxu0 0.0
        %679 = vmatpush1.msra.mxu0 0.0
        %680 = vmatprep.subr.mxu0 0.0
        %681 = vmatpush1.msra.mxu0 0.0
        %682 = vmatprep.subr.mxu0 0.0
        %683 = vmatpush1.msra.mxu0 0.0
        %684 = vmatprep.subr.mxu0 0.0
        %685 = vmatpush1.msra.mxu0 0.0
        %686 = vmatprep.subr.mxu0 0.0
        %687 = vmatpush1.msra.mxu0 0.0
        %688 = vmatprep.subr.mxu0 0.0
        %689 = vmatpush1.msra.mxu0 0.0
        %690 = vmatprep.subr.mxu0 0.0
        %691 = vmatpush1.msra.mxu0 0.0
        %692 = vmatprep.subr.mxu0 0.0
        %693 = vmatpush1.msra.mxu0 0.0
        %694 = vmatprep.subr.mxu0 0.0
        %695 = vmatpush1.msra.mxu0 0.0
        %696 = vmatprep.mubr.f32.mxu0 0.0
        %697 = vmatmul.mubr.f32.gmra.mrb[0].mxu0 %v585
        %v698 = vpop.f32.mrb[0].mxu0
        %v699 = vadd.f32 %v506, %v698
        %v700 = vpop.f32.mrb[0].mxu0
        %701 = vmatprep.mubr.f32.mxu0 0.0
        %702 = vmatmul.mubr.f32.gmra.mrb[0].mxu0 %v588
        %v703 = vpop.f32.mrb[0].mxu0
        %v704 = vadd.f32 %v511, %v703
        %v705 = vpop.f32.mrb[0].mxu0
        %706 = vmatprep.mubr.f32.mxu0 0.0
        %707 = vmatmul.mubr.f32.gmra.mrb[0].mxu0 %v591
        %v708 = vpop.f32.mrb[0].mxu0
        %v709 = vadd.f32 %v516, %v708
        %v710 = vpop.f32.mrb[0].mxu0
        %711 = vmatprep.mubr.f32.mxu0 0.0
        %712 = vmatmul.mubr.f32.gmra.mrb[0].mxu0 %v594
        %v713 = vpop.f32.mrb[0].mxu0
        %v714 = vadd.f32 %v521, %v713
        %v715 = vpop.f32.mrb[0].mxu0
        %716 = vmatprep.mubr.f32.mxu0 0.0
        %717 = vmatmul.mubr.f32.gmra.mrb[0].mxu0 %v597
        %v718 = vpop.f32.mrb[0].mxu0
        %v719 = vadd.f32 %v526, %v718
        %v720 = vpop.f32.mrb[0].mxu0
        %721 = vmatprep.mubr.f32.mxu0 0.0
        %722 = vmatmul.mubr.f32.gmra.mrb[0].mxu0 %v600
        %v723 = vpop.f32.mrb[0].mxu0
        %v724 = vadd.f32 %v531, %v723
        %v725 = vpop.f32.mrb[0].mxu0
        %726 = vmatprep.mubr.f32.mxu0 0.0
        %727 = vmatmul.mubr.f32.gmra.mrb[0].mxu0 %v603
        %v728 = vpop.f32.mrb[0].mxu0
        %v729 = vadd.f32 %v536, %v728
        %v730 = vpop.f32.mrb[0].mxu0
        %731 = vmatprep.mubr.f32.mxu0 0.0
        %732 = vmatmul.mubr.f32.gmra.mrb[0].mxu0 %v606
        %v733 = vpop.f32.mrb[0].mxu0
        %v734 = vadd.f32 %v541, %v733
        %v735 = vpop.f32.mrb[0].mxu0
        %736 = vmatprep.mubr.f32.mxu0 0.0
        %737 = vmatmul.mubr.f32.gmra.mrb[0].mxu0 %v609
        %v738 = vpop.f32.mrb[0].mxu0
        %v739 = vadd.f32 %v546, %v738
        %v740 = vpop.f32.mrb[0].mxu0
        %741 = vmatprep.mubr.f32.mxu0 0.0
        %742 = vmatmul.mubr.f32.gmra.mrb[0].mxu0 %v612
        %v743 = vpop.f32.mrb[0].mxu0
        %v744 = vadd.f32 %v551, %v743
        %v745 = vpop.f32.mrb[0].mxu0
        %746 = vmatprep.mubr.f32.mxu0 0.0
        %747 = vmatmul.mubr.f32.gmra.mrb[0].mxu0 %v615
        %v748 = vpop.f32.mrb[0].mxu0
        %v749 = vadd.f32 %v556, %v748
        %v750 = vpop.f32.mrb[0].mxu0
        %751 = vmatprep.mubr.f32.mxu0 0.0
        %752 = vmatmul.mubr.f32.gmra.mrb[0].mxu0 %v618
        %v753 = vpop.f32.mrb[0].mxu0
        %v754 = vadd.f32 %v561, %v753
        %v755 = vpop.f32.mrb[0].mxu0
        %756 = vmatprep.mubr.f32.mxu0 0.0
        %757 = vmatmul.mubr.f32.gmra.mrb[0].mxu0 %v621
        %v758 = vpop.f32.mrb[0].mxu0
        %v759 = vadd.f32 %v566, %v758
        %v760 = vpop.f32.mrb[0].mxu0
        %761 = vmatprep.mubr.f32.mxu0 0.0
        %762 = vmatmul.mubr.f32.gmra.mrb[0].mxu0 %v624
        %v763 = vpop.f32.mrb[0].mxu0
        %v764 = vadd.f32 %v571, %v763
        %v765 = vpop.f32.mrb[0].mxu0
        %766 = vmatprep.mubr.f32.mxu0 0.0
        %767 = vmatmul.mubr.f32.gmra.mrb[0].mxu0 %v627
        %v768 = vpop.f32.mrb[0].mxu0
        %v769 = vadd.f32 %v576, %v768
        %v770 = vpop.f32.mrb[0].mxu0
        %771 = vmatprep.mubr.f32.mxu0 0.0
        %772 = vmatmul.mubr.f32.gmra.mrb[0].mxu0 %v630
        %v773 = vpop.f32.mrb[0].mxu0
        %v774 = vadd.f32 %v581, %v773
        %v775 = vpop.f32.mrb[0].mxu0
        %776 = vdwg.mxu0
        %v777 = vld [vmem:[%s4] sm:$0x1]
        %v779 = vlaneseq
        %v780 = vshrl.u32 %v779, 7
        %v781 = vsub.s32 0, %v780
        %v782 = vrot.slane %v777, %v781
        %v784 = vadd.f32 %v699, %v782
        %v785 = vadd.f32 %v704, %v782
        %v786 = vadd.f32 %v709, %v782
        %v787 = vadd.f32 %v714, %v782
        %v788 = vadd.f32 %v719, %v782
        %v789 = vadd.f32 %v724, %v782
        %v790 = vadd.f32 %v729, %v782
        %v791 = vadd.f32 %v734, %v782
        %v792 = vadd.f32 %v739, %v782
        %v793 = vadd.f32 %v744, %v782
        %v794 = vadd.f32 %v749, %v782
        %v795 = vadd.f32 %v754, %v782
        %v796 = vadd.f32 %v759, %v782
        %v797 = vadd.f32 %v764, %v782
        %v798 = vadd.f32 %v769, %v782
        %v799 = vadd.f32 %v774, %v782
        %v800 = vmax.f32 %v784, 0.0
        %v801 = vmax.f32 %v785, 0.0
        %v802 = vmax.f32 %v786, 0.0
        %v803 = vmax.f32 %v787, 0.0
        %v804 = vmax.f32 %v788, 0.0
        %v805 = vmax.f32 %v789, 0.0
        %v806 = vmax.f32 %v790, 0.0
        %v807 = vmax.f32 %v791, 0.0
        %v808 = vmax.f32 %v792, 0.0
        %v809 = vmax.f32 %v793, 0.0
        %v810 = vmax.f32 %v794, 0.0
        %v811 = vmax.f32 %v795, 0.0
        %v812 = vmax.f32 %v796, 0.0
        %v813 = vmax.f32 %v797, 0.0
        %v814 = vmax.f32 %v798, 0.0
        %v815 = vmax.f32 %v799, 0.0
        %v816 = vld [vmem:[%s5] sm:$0xff]
        %v817 = vld [vmem:[%s5 + $0x8] sm:$0xff]
        %v818 = vld [vmem:[%s5 + $0x10] sm:$0xff]
        %v819 = vld [vmem:[%s5 + $0x18] sm:$0xff]
        %v820 = vld [vmem:[%s6] sm:$0x1]
        %v822 = vlaneseq
        %v823 = vshrl.u32 %v822, 7
        %v824 = vsub.s32 0, %v823
        %v825 = vrot.slane %v820, %v824
        %vm827 = vcmask 261120
        %v829 = vsel %vm827, %v800, 0
        %v832 = vsel %vm827, %v801, 0
        %v835 = vsel %vm827, %v802, 0
        %v838 = vsel %vm827, %v803, 0
        %v841 = vsel %vm827, %v804, 0
        %v844 = vsel %vm827, %v805, 0
        %v847 = vsel %vm827, %v806, 0
        %v850 = vsel %vm827, %v807, 0
        %v853 = vsel %vm827, %v808, 0
        %v856 = vsel %vm827, %v809, 0
        %v859 = vsel %vm827, %v810, 0
        %v862 = vsel %vm827, %v811, 0
        %v865 = vsel %vm827, %v812, 0
        %v868 = vsel %vm827, %v813, 0
        %v871 = vsel %vm827, %v814, 0
        %v874 = vsel %vm827, %v815, 0
        %876 = vmatprep.subr.mxu0 0.0
        %877 = vmatpush1.msra.mxu0 %v816
        %878 = vmatprep.subr.mxu0 0.0
        %879 = vmatpush1.msra.mxu0 %v817
        %880 = vmatprep.subr.mxu0 0.0
        %881 = vmatpush1.msra.mxu0 %v818
        %882 = vmatprep.subr.mxu0 0.0
        %883 = vmatpush1.msra.mxu0 %v819
        %884 = vmatprep.subr.mxu0 0.0
        %885 = vmatpush1.msra.mxu0 0.0
        %886 = vmatprep.subr.mxu0 0.0
        %887 = vmatpush1.msra.mxu0 0.0
        %888 = vmatprep.subr.mxu0 0.0
        %889 = vmatpush1.msra.mxu0 0.0
        %890 = vmatprep.subr.mxu0 0.0
        %891 = vmatpush1.msra.mxu0 0.0
        %892 = vmatprep.subr.mxu0 0.0
        %893 = vmatpush1.msra.mxu0 0.0
        %894 = vmatprep.subr.mxu0 0.0
        %895 = vmatpush1.msra.mxu0 0.0
        %896 = vmatprep.subr.mxu0 0.0
        %897 = vmatpush1.msra.mxu0 0.0
        %898 = vmatprep.subr.mxu0 0.0
        %899 = vmatpush1.msra.mxu0 0.0
        %900 = vmatprep.subr.mxu0 0.0
        %901 = vmatpush1.msra.mxu0 0.0
        %902 = vmatprep.subr.mxu0 0.0
        %903 = vmatpush1.msra.mxu0 0.0
        %904 = vmatprep.subr.mxu0 0.0
        %905 = vmatpush1.msra.mxu0 0.0
        %906 = vmatprep.subr.mxu0 0.0
        %907 = vmatpush1.msra.mxu0 0.0
        %908 = vmatprep.subr.mxu0 0.0
        %909 = vmatpush1.msra.mxu0 0.0
        %910 = vmatprep.subr.mxu0 0.0
        %911 = vmatpush1.msra.mxu0 0.0
        %912 = vmatprep.subr.mxu0 0.0
        %913 = vmatpush1.msra.mxu0 0.0
        %914 = vmatprep.subr.mxu0 0.0
        %915 = vmatpush1.msra.mxu0 0.0
        %916 = vmatprep.subr.mxu0 0.0
        %917 = vmatpush1.msra.mxu0 0.0
        %918 = vmatprep.subr.mxu0 0.0
        %919 = vmatpush1.msra.mxu0 0.0
        %920 = vmatprep.subr.mxu0 0.0
        %921 = vmatpush1.msra.mxu0 0.0
        %922 = vmatprep.subr.mxu0 0.0
        %923 = vmatpush1.msra.mxu0 0.0
        %924 = vmatprep.subr.mxu0 0.0
        %925 = vmatpush1.msra.mxu0 0.0
        %926 = vmatprep.subr.mxu0 0.0
        %927 = vmatpush1.msra.mxu0 0.0
        %928 = vmatprep.subr.mxu0 0.0
        %929 = vmatpush1.msra.mxu0 0.0
        %930 = vmatprep.subr.mxu0 0.0
        %931 = vmatpush1.msra.mxu0 0.0
        %932 = vmatprep.subr.mxu0 0.0
        %933 = vmatpush1.msra.mxu0 0.0
        %934 = vmatprep.subr.mxu0 0.0
        %935 = vmatpush1.msra.mxu0 0.0
        %936 = vmatprep.subr.mxu0 0.0
        %937 = vmatpush1.msra.mxu0 0.0
        %938 = vmatprep.subr.mxu0 0.0
        %939 = vmatpush1.msra.mxu0 0.0
        %940 = vmatprep.mubr.f32.mxu0 0.0
        %941 = vmatmul.mubr.f32.gmra.mrb[0].mxu0 %v829
        %v942 = vpop.f32.mrb[0].mxu0
        %v943 = vadd.f32 %v825, %v942
        %v944 = vpop.f32.mrb[0].mxu0
        %945 = vmatprep.mubr.f32.mxu0 0.0
        %946 = vmatmul.mubr.f32.gmra.mrb[0].mxu0 %v832
        %v947 = vpop.f32.mrb[0].mxu0
        %v948 = vadd.f32 %v825, %v947
        %v949 = vpop.f32.mrb[0].mxu0
        %950 = vmatprep.mubr.f32.mxu0 0.0
        %951 = vmatmul.mubr.f32.gmra.mrb[0].mxu0 %v835
        %v952 = vpop.f32.mrb[0].mxu0
        %v953 = vadd.f32 %v825, %v952
        %v954 = vpop.f32.mrb[0].mxu0
        %955 = vmatprep.mubr.f32.mxu0 0.0
        %956 = vmatmul.mubr.f32.gmra.mrb[0].mxu0 %v838
        %v957 = vpop.f32.mrb[0].mxu0
        %v958 = vadd.f32 %v825, %v957
        %v959 = vpop.f32.mrb[0].mxu0
        %960 = vmatprep.mubr.f32.mxu0 0.0
        %961 = vmatmul.mubr.f32.gmra.mrb[0].mxu0 %v841
        %v962 = vpop.f32.mrb[0].mxu0
        %v963 = vadd.f32 %v825, %v962
        %v964 = vpop.f32.mrb[0].mxu0
        %965 = vmatprep.mubr.f32.mxu0 0.0
        %966 = vmatmul.mubr.f32.gmra.mrb[0].mxu0 %v844
        %v967 = vpop.f32.mrb[0].mxu0
        %v968 = vadd.f32 %v825, %v967
        %v969 = vpop.f32.mrb[0].mxu0
        %970 = vmatprep.mubr.f32.mxu0 0.0
        %971 = vmatmul.mubr.f32.gmra.mrb[0].mxu0 %v847
        %v972 = vpop.f32.mrb[0].mxu0
        %v973 = vadd.f32 %v825, %v972
        %v974 = vpop.f32.mrb[0].mxu0
        %975 = vmatprep.mubr.f32.mxu0 0.0
        %976 = vmatmul.mubr.f32.gmra.mrb[0].mxu0 %v850
        %v977 = vpop.f32.mrb[0].mxu0
        %v978 = vadd.f32 %v825, %v977
        %v979 = vpop.f32.mrb[0].mxu0
        %980 = vmatprep.mubr.f32.mxu0 0.0
        %981 = vmatmul.mubr.f32.gmra.mrb[0].mxu0 %v853
        %v982 = vpop.f32.mrb[0].mxu0
        %v983 = vadd.f32 %v825, %v982
        %v984 = vpop.f32.mrb[0].mxu0
        %985 = vmatprep.mubr.f32.mxu0 0.0
        %986 = vmatmul.mubr.f32.gmra.mrb[0].mxu0 %v856
        %v987 = vpop.f32.mrb[0].mxu0
        %v988 = vadd.f32 %v825, %v987
        %v989 = vpop.f32.mrb[0].mxu0
        %990 = vmatprep.mubr.f32.mxu0 0.0
        %991 = vmatmul.mubr.f32.gmra.mrb[0].mxu0 %v859
        %v992 = vpop.f32.mrb[0].mxu0
        %v993 = vadd.f32 %v825, %v992
        %v994 = vpop.f32.mrb[0].mxu0
        %995 = vmatprep.mubr.f32.mxu0 0.0
        %996 = vmatmul.mubr.f32.gmra.mrb[0].mxu0 %v862
        %v997 = vpop.f32.mrb[0].mxu0
        %v998 = vadd.f32 %v825, %v997
        %v999 = vpop.f32.mrb[0].mxu0
        %1000 = vmatprep.mubr.f32.mxu0 0.0
        %1001 = vmatmul.mubr.f32.gmra.mrb[0].mxu0 %v865
        %v1002 = vpop.f32.mrb[0].mxu0
        %v1003 = vadd.f32 %v825, %v1002
        %v1004 = vpop.f32.mrb[0].mxu0
        %1005 = vmatprep.mubr.f32.mxu0 0.0
        %1006 = vmatmul.mubr.f32.gmra.mrb[0].mxu0 %v868
        %v1007 = vpop.f32.mrb[0].mxu0
        %v1008 = vadd.f32 %v825, %v1007
        %v1009 = vpop.f32.mrb[0].mxu0
        %1010 = vmatprep.mubr.f32.mxu0 0.0
        %1011 = vmatmul.mubr.f32.gmra.mrb[0].mxu0 %v871
        %v1012 = vpop.f32.mrb[0].mxu0
        %v1013 = vadd.f32 %v825, %v1012
        %v1014 = vpop.f32.mrb[0].mxu0
        %1015 = vmatprep.mubr.f32.mxu0 0.0
        %1016 = vmatmul.mubr.f32.gmra.mrb[0].mxu0 %v874
        %v1017 = vpop.f32.mrb[0].mxu0
        %v1018 = vadd.f32 %v825, %v1017
        %v1019 = vpop.f32.mrb[0].mxu0
        %1020 = vdwg.mxu0
        %v1021 = vmax.f32 %v943, 0.0
        %v1022 = vmax.f32 %v948, 0.0
        %v1023 = vmax.f32 %v953, 0.0
        %v1024 = vmax.f32 %v958, 0.0
        %v1025 = vmax.f32 %v963, 0.0
        %v1026 = vmax.f32 %v968, 0.0
        %v1027 = vmax.f32 %v973, 0.0
        %v1028 = vmax.f32 %v978, 0.0
        %v1029 = vmax.f32 %v983, 0.0
        %v1030 = vmax.f32 %v988, 0.0
        %v1031 = vmax.f32 %v993, 0.0
        %v1032 = vmax.f32 %v998, 0.0
        %v1033 = vmax.f32 %v1003, 0.0
        %v1034 = vmax.f32 %v1008, 0.0
        %v1035 = vmax.f32 %v1013, 0.0
        %v1036 = vmax.f32 %v1018, 0.0
        %v1037 = vld [vmem:[%s7] sm:$0xff]
        %v1038 = vld [vmem:[%s7 + $0x8] sm:$0xff]
        %v1039 = vld [vmem:[%s7 + $0x10] sm:$0xff]
        %v1040 = vld [vmem:[%s7 + $0x18] sm:$0xff]
        %v1041 = vld [vmem:[%s8] sm:$0x1]
        %v1043 = vlaneseq
        %v1044 = vshrl.u32 %v1043, 7
        %v1045 = vsub.s32 0, %v1044
        %v1046 = vrot.slane %v1041, %v1045
        %v1049 = vsel %vm827, %v1021, 0
        %v1052 = vsel %vm827, %v1022, 0
        %v1055 = vsel %vm827, %v1023, 0
        %v1058 = vsel %vm827, %v1024, 0
        %v1061 = vsel %vm827, %v1025, 0
        %v1064 = vsel %vm827, %v1026, 0
        %v1067 = vsel %vm827, %v1027, 0
        %v1070 = vsel %vm827, %v1028, 0
        %v1073 = vsel %vm827, %v1029, 0
        %v1076 = vsel %vm827, %v1030, 0
        %v1079 = vsel %vm827, %v1031, 0
        %v1082 = vsel %vm827, %v1032, 0
        %v1085 = vsel %vm827, %v1033, 0
        %v1088 = vsel %vm827, %v1034, 0
        %v1091 = vsel %vm827, %v1035, 0
        %v1094 = vsel %vm827, %v1036, 0
        %1096 = vmatprep.subr.mxu0 0.0
        %1097 = vmatpush1.msra.mxu0 %v1037
        %1098 = vmatprep.subr.mxu0 0.0
        %1099 = vmatpush1.msra.mxu0 %v1038
        %1100 = vmatprep.subr.mxu0 0.0
        %1101 = vmatpush1.msra.mxu0 %v1039
        %1102 = vmatprep.subr.mxu0 0.0
        %1103 = vmatpush1.msra.mxu0 %v1040
        %1104 = vmatprep.subr.mxu0 0.0
        %1105 = vmatpush1.msra.mxu0 0.0
        %1106 = vmatprep.subr.mxu0 0.0
        %1107 = vmatpush1.msra.mxu0 0.0
        %1108 = vmatprep.subr.mxu0 0.0
        %1109 = vmatpush1.msra.mxu0 0.0
        %1110 = vmatprep.subr.mxu0 0.0
        %1111 = vmatpush1.msra.mxu0 0.0
        %1112 = vmatprep.subr.mxu0 0.0
        %1113 = vmatpush1.msra.mxu0 0.0
        %1114 = vmatprep.subr.mxu0 0.0
        %1115 = vmatpush1.msra.mxu0 0.0
        %1116 = vmatprep.subr.mxu0 0.0
        %1117 = vmatpush1.msra.mxu0 0.0
        %1118 = vmatprep.subr.mxu0 0.0
        %1119 = vmatpush1.msra.mxu0 0.0
        %1120 = vmatprep.subr.mxu0 0.0
        %1121 = vmatpush1.msra.mxu0 0.0
        %1122 = vmatprep.subr.mxu0 0.0
        %1123 = vmatpush1.msra.mxu0 0.0
        %1124 = vmatprep.subr.mxu0 0.0
        %1125 = vmatpush1.msra.mxu0 0.0
        %1126 = vmatprep.subr.mxu0 0.0
        %1127 = vmatpush1.msra.mxu0 0.0
        %1128 = vmatprep.subr.mxu0 0.0
        %1129 = vmatpush1.msra.mxu0 0.0
        %1130 = vmatprep.subr.mxu0 0.0
        %1131 = vmatpush1.msra.mxu0 0.0
        %1132 = vmatprep.subr.mxu0 0.0
        %1133 = vmatpush1.msra.mxu0 0.0
        %1134 = vmatprep.subr.mxu0 0.0
        %1135 = vmatpush1.msra.mxu0 0.0
        %1136 = vmatprep.subr.mxu0 0.0
        %1137 = vmatpush1.msra.mxu0 0.0
        %1138 = vmatprep.subr.mxu0 0.0
        %1139 = vmatpush1.msra.mxu0 0.0
        %1140 = vmatprep.subr.mxu0 0.0
        %1141 = vmatpush1.msra.mxu0 0.0
        %1142 = vmatprep.subr.mxu0 0.0
        %1143 = vmatpush1.msra.mxu0 0.0
        %1144 = vmatprep.subr.mxu0 0.0
        %1145 = vmatpush1.msra.mxu0 0.0
        %1146 = vmatprep.subr.mxu0 0.0
        %1147 = vmatpush1.msra.mxu0 0.0
        %1148 = vmatprep.subr.mxu0 0.0
        %1149 = vmatpush1.msra.mxu0 0.0
        %1150 = vmatprep.subr.mxu0 0.0
        %1151 = vmatpush1.msra.mxu0 0.0
        %1152 = vmatprep.subr.mxu0 0.0
        %1153 = vmatpush1.msra.mxu0 0.0
        %1154 = vmatprep.subr.mxu0 0.0
        %1155 = vmatpush1.msra.mxu0 0.0
        %1156 = vmatprep.subr.mxu0 0.0
        %1157 = vmatpush1.msra.mxu0 0.0
        %1158 = vmatprep.subr.mxu0 0.0
        %1159 = vmatpush1.msra.mxu0 0.0
        %1160 = vmatprep.mubr.f32.mxu0 0.0
        %1161 = vmatmul.mubr.f32.gmra.mrb[0].mxu0 %v1049
        %v1162 = vpop.f32.mrb[0].mxu0
        %v1163 = vadd.f32 %v1046, %v1162
        %v1164 = vpop.f32.mrb[0].mxu0
        %1165 = vmatprep.mubr.f32.mxu0 0.0
        %1166 = vmatmul.mubr.f32.gmra.mrb[0].mxu0 %v1052
        %v1167 = vpop.f32.mrb[0].mxu0
        %v1168 = vadd.f32 %v1046, %v1167
        %v1169 = vpop.f32.mrb[0].mxu0
        %1170 = vmatprep.mubr.f32.mxu0 0.0
        %1171 = vmatmul.mubr.f32.gmra.mrb[0].mxu0 %v1055
        %v1172 = vpop.f32.mrb[0].mxu0
        %v1173 = vadd.f32 %v1046, %v1172
        %v1174 = vpop.f32.mrb[0].mxu0
        %1175 = vmatprep.mubr.f32.mxu0 0.0
        %1176 = vmatmul.mubr.f32.gmra.mrb[0].mxu0 %v1058
        %v1177 = vpop.f32.mrb[0].mxu0
        %v1178 = vadd.f32 %v1046, %v1177
        %v1179 = vpop.f32.mrb[0].mxu0
        %1180 = vmatprep.mubr.f32.mxu0 0.0
        %1181 = vmatmul.mubr.f32.gmra.mrb[0].mxu0 %v1061
        %v1182 = vpop.f32.mrb[0].mxu0
        %v1183 = vadd.f32 %v1046, %v1182
        %v1184 = vpop.f32.mrb[0].mxu0
        %1185 = vmatprep.mubr.f32.mxu0 0.0
        %1186 = vmatmul.mubr.f32.gmra.mrb[0].mxu0 %v1064
        %v1187 = vpop.f32.mrb[0].mxu0
        %v1188 = vadd.f32 %v1046, %v1187
        %v1189 = vpop.f32.mrb[0].mxu0
        %1190 = vmatprep.mubr.f32.mxu0 0.0
        %1191 = vmatmul.mubr.f32.gmra.mrb[0].mxu0 %v1067
        %v1192 = vpop.f32.mrb[0].mxu0
        %v1193 = vadd.f32 %v1046, %v1192
        %v1194 = vpop.f32.mrb[0].mxu0
        %1195 = vmatprep.mubr.f32.mxu0 0.0
        %1196 = vmatmul.mubr.f32.gmra.mrb[0].mxu0 %v1070
        %v1197 = vpop.f32.mrb[0].mxu0
        %v1198 = vadd.f32 %v1046, %v1197
        %v1199 = vpop.f32.mrb[0].mxu0
        %1200 = vmatprep.mubr.f32.mxu0 0.0
        %1201 = vmatmul.mubr.f32.gmra.mrb[0].mxu0 %v1073
        %v1202 = vpop.f32.mrb[0].mxu0
        %v1203 = vadd.f32 %v1046, %v1202
        %v1204 = vpop.f32.mrb[0].mxu0
        %1205 = vmatprep.mubr.f32.mxu0 0.0
        %1206 = vmatmul.mubr.f32.gmra.mrb[0].mxu0 %v1076
        %v1207 = vpop.f32.mrb[0].mxu0
        %v1208 = vadd.f32 %v1046, %v1207
        %v1209 = vpop.f32.mrb[0].mxu0
        %1210 = vmatprep.mubr.f32.mxu0 0.0
        %1211 = vmatmul.mubr.f32.gmra.mrb[0].mxu0 %v1079
        %v1212 = vpop.f32.mrb[0].mxu0
        %v1213 = vadd.f32 %v1046, %v1212
        %v1214 = vpop.f32.mrb[0].mxu0
        %1215 = vmatprep.mubr.f32.mxu0 0.0
        %1216 = vmatmul.mubr.f32.gmra.mrb[0].mxu0 %v1082
        %v1217 = vpop.f32.mrb[0].mxu0
        %v1218 = vadd.f32 %v1046, %v1217
        %v1219 = vpop.f32.mrb[0].mxu0
        %1220 = vmatprep.mubr.f32.mxu0 0.0
        %1221 = vmatmul.mubr.f32.gmra.mrb[0].mxu0 %v1085
        %v1222 = vpop.f32.mrb[0].mxu0
        %v1223 = vadd.f32 %v1046, %v1222
        %v1224 = vpop.f32.mrb[0].mxu0
        %1225 = vmatprep.mubr.f32.mxu0 0.0
        %1226 = vmatmul.mubr.f32.gmra.mrb[0].mxu0 %v1088
        %v1227 = vpop.f32.mrb[0].mxu0
        %v1228 = vadd.f32 %v1046, %v1227
        %v1229 = vpop.f32.mrb[0].mxu0
        %1230 = vmatprep.mubr.f32.mxu0 0.0
        %1231 = vmatmul.mubr.f32.gmra.mrb[0].mxu0 %v1091
        %v1232 = vpop.f32.mrb[0].mxu0
        %v1233 = vadd.f32 %v1046, %v1232
        %v1234 = vpop.f32.mrb[0].mxu0
        %1235 = vmatprep.mubr.f32.mxu0 0.0
        %1236 = vmatmul.mubr.f32.gmra.mrb[0].mxu0 %v1094
        %v1237 = vpop.f32.mrb[0].mxu0
        %v1238 = vadd.f32 %v1046, %v1237
        %v1239 = vpop.f32.mrb[0].mxu0
        %1240 = vdwg.mxu0
        %v1241 = vmax.f32 %v1163, -20.0
        %v1242 = vmax.f32 %v1168, -20.0
        %v1243 = vmax.f32 %v1173, -20.0
        %v1244 = vmax.f32 %v1178, -20.0
        %v1245 = vmax.f32 %v1183, -20.0
        %v1246 = vmax.f32 %v1188, -20.0
        %v1247 = vmax.f32 %v1193, -20.0
        %v1248 = vmax.f32 %v1198, -20.0
        %v1249 = vmax.f32 %v1203, -20.0
        %v1250 = vmax.f32 %v1208, -20.0
        %v1251 = vmax.f32 %v1213, -20.0
        %v1252 = vmax.f32 %v1218, -20.0
        %v1253 = vmax.f32 %v1223, -20.0
        %v1254 = vmax.f32 %v1228, -20.0
        %v1255 = vmax.f32 %v1233, -20.0
        %v1256 = vmax.f32 %v1238, -20.0
        %v1257 = vmin.f32 %v1241, 2.0
        %v1258 = vmin.f32 %v1242, 2.0
        %v1259 = vmin.f32 %v1243, 2.0
        %v1260 = vmin.f32 %v1244, 2.0
        %v1261 = vmin.f32 %v1245, 2.0
        %v1262 = vmin.f32 %v1246, 2.0
        %v1263 = vmin.f32 %v1247, 2.0
        %v1264 = vmin.f32 %v1248, 2.0
        %v1265 = vmin.f32 %v1249, 2.0
        %v1266 = vmin.f32 %v1250, 2.0
        %v1267 = vmin.f32 %v1251, 2.0
        %v1268 = vmin.f32 %v1252, 2.0
        %v1269 = vmin.f32 %v1253, 2.0
        %v1270 = vmin.f32 %v1254, 2.0
        %v1271 = vmin.f32 %v1255, 2.0
        %v1272 = vmin.f32 %v1256, 2.0
        %v1273 = vmul.f32 %v1257, 1.442695
        %v1274 = vpow.pop %v1273
        %v1275 = vmul.f32 %v1258, 1.442695
        %v1276 = vpow.pop %v1275
        %v1277 = vmul.f32 %v1259, 1.442695
        %v1278 = vpow.pop %v1277
        %v1279 = vmul.f32 %v1260, 1.442695
        %v1280 = vpow.pop %v1279
        %v1281 = vmul.f32 %v1261, 1.442695
        %v1282 = vpow.pop %v1281
        %v1283 = vmul.f32 %v1262, 1.442695
        %v1284 = vpow.pop %v1283
        %v1285 = vmul.f32 %v1263, 1.442695
        %v1286 = vpow.pop %v1285
        %v1287 = vmul.f32 %v1264, 1.442695
        %v1288 = vpow.pop %v1287
        %v1289 = vmul.f32 %v1265, 1.442695
        %v1290 = vpow.pop %v1289
        %v1291 = vmul.f32 %v1266, 1.442695
        %v1292 = vpow.pop %v1291
        %v1293 = vmul.f32 %v1267, 1.442695
        %v1294 = vpow.pop %v1293
        %v1295 = vmul.f32 %v1268, 1.442695
        %v1296 = vpow.pop %v1295
        %v1297 = vmul.f32 %v1269, 1.442695
        %v1298 = vpow.pop %v1297
        %v1299 = vmul.f32 %v1270, 1.442695
        %v1300 = vpow.pop %v1299
        %v1301 = vmul.f32 %v1271, 1.442695
        %v1302 = vpow.pop %v1301
        %v1303 = vmul.f32 %v1272, 1.442695
        %v1304 = vpow.pop %v1303
        %v1305 = vlaneseq
        %v1306 = vand.u32 %v1305, 127
        %vm1307 = vcmp.ge.s32.totalorder %v1306, 8
        %vm1308 = vcmp.lt.s32.totalorder %v1306, 16
        %vm1309 = vmand %vm1307, %vm1308
        %v1310 = vsel %vm1309, %v1274, %v1163
        %v1311 = vsel %vm1309, %v1276, %v1168
        %v1312 = vsel %vm1309, %v1278, %v1173
        %v1313 = vsel %vm1309, %v1280, %v1178
        %v1314 = vsel %vm1309, %v1282, %v1183
        %v1315 = vsel %vm1309, %v1284, %v1188
        %v1316 = vsel %vm1309, %v1286, %v1193
        %v1317 = vsel %vm1309, %v1288, %v1198
        %v1318 = vsel %vm1309, %v1290, %v1203
        %v1319 = vsel %vm1309, %v1292, %v1208
        %v1320 = vsel %vm1309, %v1294, %v1213
        %v1321 = vsel %vm1309, %v1296, %v1218
        %v1322 = vsel %vm1309, %v1298, %v1223
        %v1323 = vsel %vm1309, %v1300, %v1228
        %v1324 = vsel %vm1309, %v1302, %v1233
        %v1325 = vsel %vm1309, %v1304, %v1238
        %1326 = vst [vmem:[%s342] sm:$0xff] %v1310
        %1327 = vst [vmem:[%s342 + $0x8] sm:$0xff] %v1311
        %1328 = vst [vmem:[%s342 + $0x10] sm:$0xff] %v1312
        %1329 = vst [vmem:[%s342 + $0x18] sm:$0xff] %v1313
        %1330 = vst [vmem:[%s342 + $0x20] sm:$0xff] %v1314
        %1331 = vst [vmem:[%s342 + $0x28] sm:$0xff] %v1315
        %1332 = vst [vmem:[%s342 + $0x30] sm:$0xff] %v1316
        %1333 = vst [vmem:[%s342 + $0x38] sm:$0xff] %v1317
        %1334 = vst [vmem:[%s342 + $0x40] sm:$0xff] %v1318
        %1335 = vst [vmem:[%s342 + $0x48] sm:$0xff] %v1319
        %1336 = vst [vmem:[%s342 + $0x50] sm:$0xff] %v1320
        %1337 = vst [vmem:[%s342 + $0x58] sm:$0xff] %v1321
        %1338 = vst [vmem:[%s342 + $0x60] sm:$0xff] %v1322
        %1339 = vst [vmem:[%s342 + $0x68] sm:$0xff] %v1323
        %1340 = vst [vmem:[%s342 + $0x70] sm:$0xff] %v1324
        %1341 = vst [vmem:[%s342 + $0x78] sm:$0xff] %v1325
        %s1342 = sand.u32 %s230, 1
        %s1343 = scalar_lea.sflag [#allocation3], %s1342
        %s1344 = sand.u32 %s230, 1
        %s1345 = smul.addr %s1344, 128
        %s1346 = scalar_lea.vmem [#allocation2], %s1345
        // Predicated region
        $region57: #{tpu_custom_call.1} parent=55 // pred_check
          %p1347 = pneg %p240
        $region58: #{tpu_custom_call.1} parent=55 // pred_check_branch
          %1349 = sbr.rel (%p1347) target = $region60
        $region59: #{tpu_custom_call.1} parent=55 // pred_region
          %s1350 = smul.u32 16, %s23
          %s1352 = ssub.s32 2048, 2048
          %1353 = vsyncadd %s1343, %s1352
          %s1354 = smul.addr %s1350, 128
          %s1355 = scalar_lea.hbm %s9, %s1354
          %s1356 = sshll.u32 %s1346, 4
          %s1357 = int_to_ptr.vmem [resolvable:$true] %s1356
          %1362 = dma.vmem_to_hbm [thread:$0]  %s1357, 2048, %s1355, %s1343, 128, 128, 8
        $region60: #{tpu_custom_call.1} parent=55 // pred_fallthru
          _
      $region56: #{tpu_custom_call.1} parent=5 // pred_fallthru
        _
      %p1363 = scmp.le.s32.totalorder 2, %s18
      // Predicated region
      $region61: #{tpu_custom_call.1} parent=5 // pred_check
        %p1364 = pneg %p1363
      $region62: #{tpu_custom_call.1} parent=5 // pred_check_branch
        %1366 = sbr.rel (%p1364) target = $region64
      $region63: #{tpu_custom_call.1} parent=5 // pred_region
        %s1367 = ssub.s32 %s18, 2
        // Predicated region
        $region65: #{tpu_custom_call.1} parent=63 // pred_check
          %p1368 = pneg %p246
        $region66: #{tpu_custom_call.1} parent=63 // pred_check_branch
          %1370 = sbr.rel (%p1368) target = $region68
        $region67: #{tpu_custom_call.1} parent=63 // pred_region
          %s1371 = sand.u32 %s231, 1
          %s1372 = scalar_lea.sflag [#allocation3], %s1371
          %s1373 = sand.u32 %s231, 1
          %s1374 = smul.addr %s1373, 128
          %s1375 = scalar_lea.vmem [#allocation2], %s1374
          %1376 = dma.done %s1372, 2048
        $region68: #{tpu_custom_call.1} parent=63 // pred_fallthru
          _
      $region64: #{tpu_custom_call.1} parent=5 // pred_fallthru
        _
    $region6: #{tpu_custom_call.1} parent=1 // loop_footer
      %s22 = sadd.s32 1, %s18
    $region7: #{tpu_custom_call.1} parent=1 // loop_footer_branch
      %17 = sbr.rel target = $region3
    $region8: #{tpu_custom_call.1} parent=1 // loop_exit
      _
    %1377 = vsyncpa [#allocation3], 1
    %s1378 = scalar_lea.sflag [#allocation3], 1
    %1379 = vsyncpa %s1378, 1

</llo_original>
